<compile_context>
chip_gen: v7x
topology: tpu7x:2x2x1
jax: 0.10.0
libtpu: 0.0.40
codegen_flags: <defaults>
</compile_context>

<pallas_src>
import math
import jax
import jax.numpy as jnp
from jax.experimental import pallas as pl
from jax.experimental.pallas import tpu as pltpu

# ---- synthetic "gpt_model" hyper-params (small, deterministic) --------------
B = 2                         # batch
T = 9                         # raw sequence length fed to the wrapper
S = T - 1                     # model sequence length after autoregressive shift
D = 32                        # model dim
F = 64                        # FFN hidden dim
V = 128                       # vocab size (lane-dense output)
FFP = 128                     # FFN hidden padded to a full 128-lane vreg
MAX_SEQUENCE_LENGTH = S

assert S > 0 and (S & (S - 1)) == 0, "XOR same-batch trick needs power-of-two S"

# packed 32-lane-wide weight slab row offsets: [tok_emb | pos(tiled) | WqWk^T | WvWo]
POS_OFF = V                   # 128
QK_OFF = V + B * S            # 144
VO_OFF = QK_OFF + D           # 176
W32_ROWS = VO_OFF + D         # 208
# packed 128-lane-wide weight slab row offsets: [W1(pad) | W2@Wout(pad) | Wout]
W1_OFF = 0
W2OUT_OFF = D                 # 32
WOUT_OFF = D + FFP            # 160
W128_ROWS = WOUT_OFF + D      # 192


def gpt_fused_kernel(ids_ref, mask_ref, w32_ref, w128_ref, out_ref):
    """Whole GPT forward in one invocation.
       * Embedding lookup = one-hot(ids) @ tok_emb on the MXU (no dynamic
         gather), positional add fused.
       * Attention is ONE block-diagonal pass over the folded (B*S, D)
         activations: scores = (h @ WqWk^T) @ h^T, masked with
         kron(I_B, causal) AND the key-padding mask; ctx@Wo collapses to
         attn @ (h @ WvWo).  Everything stays in vregs (no VMEM scratch).
       * FFN + vocab projection use the pre-folded W2@Wout so h2@Wout runs
         off the critical chain.  MXU inputs bf16, accum/softmax f32."""
    bs = ids_ref.shape[0]                                     # B*S
    scale = jnp.float32(1.0 / math.sqrt(D))

    # ---- fused embedding: one-hot(ids) @ tok_emb (MXU) + positional add ----
    lane_v = jax.lax.broadcasted_iota(jnp.int32, (bs, V), 1)
    onehot = (lane_v == ids_ref[...]).astype(jnp.bfloat16)    # (BS, V) bf16
    h_f32 = jnp.dot(onehot, w32_ref[0:V, :],
                    preferred_element_type=jnp.float32)       # (BS, D) f32
    h_f32 = h_f32 + w32_ref[POS_OFF:POS_OFF + bs, :].astype(jnp.float32)
    h_bf = h_f32.astype(jnp.bfloat16)

    # ---- block-diagonal masked-causal attention over the folded batch ------
    # (h @ Wq)(h @ Wk)^T == (h @ (Wq Wk^T)) @ h^T   (Wq Wk^T pre-folded)
    hqk = jnp.dot(h_bf, w32_ref[QK_OFF:QK_OFF + D, :],
                  preferred_element_type=jnp.float32).astype(jnp.bfloat16)
    # attn @ V @ Wo == attn @ (h @ (Wv Wo))          (Wv Wo pre-folded)
    hvo = jnp.dot(h_bf, w32_ref[VO_OFF:VO_OFF + D, :],
                  preferred_element_type=jnp.float32).astype(jnp.bfloat16)

    s = jax.lax.dot_general(hqk, h_bf, (((1,), (1,)), ((), ())),
                            preferred_element_type=jnp.float32) * scale  # (BS,BS)

    row = jax.lax.broadcasted_iota(jnp.int32, (bs, bs), 0)
    col = jax.lax.broadcasted_iota(jnp.int32, (bs, bs), 1)
    same_batch = (row ^ col) < S              # valid because S is a power of two
    keep = mask_ref[...] > 0.5                # (1, BS) key-padding mask (lane-major)
    allowed = same_batch & (col <= row) & keep

    # f32 softmax; masked columns contribute exactly zero probability and
    # fully-masked query rows collapse to all-zero attention context.
    s = jnp.where(allowed, s, jnp.float32(-1e9))
    m = jnp.max(s, axis=-1, keepdims=True)
    p = jnp.where(allowed, jnp.exp(s - m), 0.0)
    l = jnp.sum(p, axis=-1, keepdims=True)
    l_safe = jnp.where(l > 0.0, l, jnp.float32(1.0))
    attn = (p * pl.reciprocal(l_safe, approx=True)).astype(jnp.bfloat16)  # EUP slot

    h2 = h_f32 + jnp.dot(attn, hvo, preferred_element_type=jnp.float32)  # (BS, D)
    h2_bf = h2.astype(jnp.bfloat16)

    # ---- FFN + vocab projection (W2@Wout folded -> one fewer dependent matmul)
    ff = jnp.maximum(
        jnp.dot(h2_bf, w128_ref[W1_OFF:W1_OFF + D, :],
                preferred_element_type=jnp.float32), 0.0)                 # (BS, FFP)
    logits = jnp.dot(h2_bf, w128_ref[WOUT_OFF:WOUT_OFF + D, :],
                     preferred_element_type=jnp.float32)
    logits = logits + jnp.dot(ff.astype(jnp.bfloat16),
                              w128_ref[W2OUT_OFF:W2OUT_OFF + FFP, :],
                              preferred_element_type=jnp.float32)
    # TODO(synk): padded *query* rows still get finite (unused) logits; the
    #             downstream loss is assumed to mask them.
    out_ref[...] = logits


def gpt_forward_pallas(ids, mask_row, w32, w128):
    """ids: [B*S, 1] int32; mask_row: [1, B*S] f32 key-padding mask;
       w32/w128: packed bf16 weight slabs. Returns logits [B*S, V] f32."""
    bs = ids.shape[0]

    def full(shape):
        return pl.BlockSpec(shape, lambda i, _n=len(shape): (0,) * _n)

    return pl.pallas_call(
        gpt_fused_kernel,
        out_shape=jax.ShapeDtypeStruct((bs, V), jnp.float32),
        grid=(1,),                      # single invocation: no per-step overhead
        in_specs=[
            full(ids.shape),            # (B*S, 1) token ids (sublane-major)
            full(mask_row.shape),       # (1, B*S) key-padding mask (lane-major)
            full(w32.shape),            # packed 32-lane weights (emb/pos/attn)
            full(w128.shape),           # packed 128-lane weights (FFN/vocab)
        ],
        out_specs=full((bs, V)),
        compiler_params=pltpu.CompilerParams(
            dimension_semantics=("arbitrary",)),
    )(ids, mask_row, w32, w128)


def init_params(key):
    ks = jax.random.split(key, 9)
    tok_emb = jax.random.normal(ks[0], (V, D), jnp.float32) * 0.02
    pos_emb = jax.random.normal(ks[1], (MAX_SEQUENCE_LENGTH, D), jnp.float32) * 0.02
    wq = jax.random.normal(ks[2], (D, D), jnp.float32) * (1.0 / math.sqrt(D))
    wk = jax.random.normal(ks[3], (D, D), jnp.float32) * (1.0 / math.sqrt(D))
    wv = jax.random.normal(ks[4], (D, D), jnp.float32) * (1.0 / math.sqrt(D))
    wo = jax.random.normal(ks[5], (D, D), jnp.float32) * (1.0 / math.sqrt(D))
    w1 = jax.random.normal(ks[6], (D, F), jnp.float32) * (1.0 / math.sqrt(D))
    w2 = jax.random.normal(ks[7], (F, D), jnp.float32) * (1.0 / math.sqrt(F))
    wout = jax.random.normal(ks[8], (D, V), jnp.float32) * (1.0 / math.sqrt(D))

    # Offline algebraic pre-folds (shorten the dependent MXU chain):
    wqk = wq @ wk.T                                         # (D, D)
    wvo = wv @ wo                                           # (D, D)
    w2out = w2 @ wout                                       # (F, V)
    w1p = jnp.zeros((D, FFP), jnp.float32).at[:, :F].set(w1)        # lane-dense
    w2outp = jnp.zeros((FFP, V), jnp.float32).at[:F, :].set(w2out)  # lane-dense
    pos_tiled = jnp.tile(pos_emb[:S], (B, 1))               # bake the batch fold in

    # Two contiguous bf16 slabs (fewer DMA descriptors; static 8-aligned row
    # slices inside the kernel, all at full 32-/128-lane width).
    w32 = jnp.concatenate([tok_emb, pos_tiled, wqk, wvo], axis=0).astype(jnp.bfloat16)
    w128 = jnp.concatenate([w1p, w2outp, wout], axis=0).astype(jnp.bfloat16)
    assert w32.shape == (W32_ROWS, D) and w128.shape == (W128_ROWS, V)
    return (w32, w128)


def autoregressive_wrapper_forward(x, mask, params):
    """Exact semantics of AutoregressiveWrapper.forward:
       inp, target = x[:, :-1], x[:, 1:];  mask = mask[:, :-1];
       output = model(inp, mask);  return (output, target)."""
    inp = x[:, :-1]                              # [B, S] int32
    target = x[:, 1:]                            # [B, S] int32
    m = mask[:, :-1]                             # [B, S]
    b, s = inp.shape

    ids = inp.reshape(b * s, 1).astype(jnp.int32)          # sublane-major ids
    mask_row = m.reshape(1, b * s).astype(jnp.float32)     # lane-major key mask

    logits2d = gpt_forward_pallas(ids, mask_row, *params)  # [B*S, V]
    logits = logits2d.reshape(b, s, V)                     # [B, S, V]
    return logits, target


if __name__ == "__main__":
    key = jax.random.PRNGKey(0)
    k_tok, k_mask, k_par = jax.random.split(key, 3)

    x = jax.random.randint(k_tok, (B, T), 0, V, dtype=jnp.int32)
    # deterministic mask: first element padded out in batch 1, rest valid
    mask = jnp.ones((B, T), jnp.int32).at[1, 0].set(0)

    params = init_params(k_par)

    output, target = autoregressive_wrapper_forward(x, mask, params)
    jax.block_until_ready((output, target))

    assert output.shape == (B, S, V), output.shape
    assert target.shape == (B, S), target.shape
    assert bool(jnp.all(jnp.isfinite(output)))
    print("KERNEL_OK")
</pallas_src>

<mosaic_0001>
module attributes {stable_mosaic.version = 11 : i64} {
  func.func @gpt_fused_kernel(%arg0: i32, %arg1: memref<16x1xi32, #tpu.memory_space<vmem>>, %arg2: memref<1x16xf32, #tpu.memory_space<vmem>>, %arg3: memref<208x32xbf16, #tpu.memory_space<vmem>>, %arg4: memref<192x128xbf16, #tpu.memory_space<vmem>>, %arg5: memref<16x128xf32, #tpu.memory_space<vmem>>) attributes {dimension_semantics = [#tpu.dimension_semantics<arbitrary>], iteration_bounds = array<i64: 1>, scalar_prefetch = 0 : i64, scratch_operands = 0 : i64, tpu.core_type = #tpu.core_type<tc>, window_params = [{pipeline_mode = #tpu.pipeline_mode<synchronous>, transform_indices = @transform_0, window_bounds = array<i64: 16, 1>}, {pipeline_mode = #tpu.pipeline_mode<synchronous>, transform_indices = @transform_1, window_bounds = array<i64: 1, 16>}, {pipeline_mode = #tpu.pipeline_mode<synchronous>, transform_indices = @transform_2, window_bounds = array<i64: 208, 32>}, {pipeline_mode = #tpu.pipeline_mode<synchronous>, transform_indices = @transform_3, window_bounds = array<i64: 192, 128>}, {pipeline_mode = #tpu.pipeline_mode<synchronous>, transform_indices = @transform_4, window_bounds = array<i64: 16, 128>}]} {
    %0 = tpu.iota {dimensions = array<i32: 1>} : vector<16x128xi32>
    %c0 = arith.constant 0 : index
    %c0_0 = arith.constant 0 : index
    %1 = vector.load %arg1[%c0, %c0_0] : memref<16x1xi32, #tpu.memory_space<vmem>>, vector<16x1xi32>
    %2 = vector.broadcast %1 : vector<16x1xi32> to vector<16x128xi32>
    %3 = arith.cmpi eq, %0, %2 : vector<16x128xi32>
    %4 = arith.extui %3 : vector<16x128xi1> to vector<16x128xi32>
    %5 = arith.sitofp %4 : vector<16x128xi32> to vector<16x128xf32>
    %6 = arith.truncf %5 : vector<16x128xf32> to vector<16x128xbf16>
    %c0_1 = arith.constant 0 : index
    %c0_2 = arith.constant 0 : index
    %7 = vector.load %arg3[%c0_1, %c0_2] : memref<208x32xbf16, #tpu.memory_space<vmem>>, vector<128x32xbf16>
    %cst = arith.constant dense<0.000000e+00> : vector<16x32xf32>
    %8 = tpu.matmul %6, %7, %cst {dimension_numbers = #tpu.dot_dimension_numbers<[1], [0], [0], [1], [0, 0, 1, 1], [], []>} : vector<16x128xbf16>, vector<128x32xbf16>, vector<16x32xf32> -> vector<16x32xf32>
    %c128 = arith.constant 128 : index
    %c0_3 = arith.constant 0 : index
    %9 = vector.load %arg3[%c128, %c0_3] : memref<208x32xbf16, #tpu.memory_space<vmem>>, vector<16x32xbf16>
    %10 = arith.extf %9 : vector<16x32xbf16> to vector<16x32xf32>
    %11 = arith.addf %8, %10 : vector<16x32xf32>
    %12 = arith.truncf %11 : vector<16x32xf32> to vector<16x32xbf16>
    %c144 = arith.constant 144 : index
    %c0_4 = arith.constant 0 : index
    %13 = vector.load %arg3[%c144, %c0_4] : memref<208x32xbf16, #tpu.memory_space<vmem>>, vector<32x32xbf16>
    %cst_5 = arith.constant dense<0.000000e+00> : vector<16x32xf32>
    %14 = tpu.matmul %12, %13, %cst_5 {dimension_numbers = #tpu.dot_dimension_numbers<[1], [0], [0], [1], [0, 0, 1, 1], [], []>} : vector<16x32xbf16>, vector<32x32xbf16>, vector<16x32xf32> -> vector<16x32xf32>
    %15 = arith.truncf %14 : vector<16x32xf32> to vector<16x32xbf16>
    %c176 = arith.constant 176 : index
    %c0_6 = arith.constant 0 : index
    %16 = vector.load %arg3[%c176, %c0_6] : memref<208x32xbf16, #tpu.memory_space<vmem>>, vector<32x32xbf16>
    %cst_7 = arith.constant dense<0.000000e+00> : vector<16x32xf32>
    %17 = tpu.matmul %12, %16, %cst_7 {dimension_numbers = #tpu.dot_dimension_numbers<[1], [0], [0], [1], [0, 0, 1, 1], [], []>} : vector<16x32xbf16>, vector<32x32xbf16>, vector<16x32xf32> -> vector<16x32xf32>
    %18 = arith.truncf %17 : vector<16x32xf32> to vector<16x32xbf16>
    %cst_8 = arith.constant dense<0.000000e+00> : vector<16x16xf32>
    %19 = tpu.matmul %15, %12, %cst_8 {dimension_numbers = #tpu.dot_dimension_numbers<[1], [1], [0], [0], [0, 0, 1, 0], [], []>} : vector<16x32xbf16>, vector<16x32xbf16>, vector<16x16xf32> -> vector<16x16xf32>
    %cst_9 = arith.constant 0.176776692 : f32
    %20 = vector.broadcast %cst_9 : f32 to vector<16x16xf32>
    %21 = arith.mulf %19, %20 : vector<16x16xf32>
    %22 = tpu.iota {dimensions = array<i32: 0>} : vector<16x16xi32>
    %23 = tpu.iota {dimensions = array<i32: 1>} : vector<16x16xi32>
    %24 = arith.xori %22, %23 : vector<16x16xi32>
    %c8_i32 = arith.constant 8 : i32
    %25 = vector.broadcast %c8_i32 : i32 to vector<16x16xi32>
    %26 = arith.cmpi slt, %24, %25 : vector<16x16xi32>
    %c0_10 = arith.constant 0 : index
    %c0_11 = arith.constant 0 : index
    %27 = vector.load %arg2[%c0_10, %c0_11] : memref<1x16xf32, #tpu.memory_space<vmem>>, vector<1x16xf32>
    %cst_12 = arith.constant 5.000000e-01 : f32
    %28 = vector.broadcast %cst_12 : f32 to vector<1x16xf32>
    %29 = arith.cmpf ogt, %27, %28 : vector<1x16xf32>
    %30 = arith.cmpi sle, %23, %22 : vector<16x16xi32>
    %31 = arith.andi %26, %30 : vector<16x16xi1>
    %32 = vector.broadcast %29 : vector<1x16xi1> to vector<16x16xi1>
    %33 = arith.andi %31, %32 : vector<16x16xi1>
    %cst_13 = arith.constant -1.000000e+09 : f32
    %34 = vector.broadcast %cst_13 : f32 to vector<16x16xf32>
    %35 = arith.select %33, %21, %34 : vector<16x16xi1>, vector<16x16xf32>
    %cst_14 = arith.constant dense<0xFF800000> : vector<16xf32>
    %36 = vector.multi_reduction <maximumf>, %35, %cst_14 [1] : vector<16x16xf32> to vector<16xf32>
    %37 = vector.shape_cast %36 : vector<16xf32> to vector<16x1xf32>
    %38 = vector.broadcast %37 : vector<16x1xf32> to vector<16x16xf32>
    %39 = arith.subf %35, %38 : vector<16x16xf32>
    %40 = math.exp %39 : vector<16x16xf32>
    %cst_15 = arith.constant 0.000000e+00 : f32
    %41 = vector.broadcast %cst_15 : f32 to vector<16x16xf32>
    %42 = arith.select %33, %40, %41 : vector<16x16xi1>, vector<16x16xf32>
    %cst_16 = arith.constant dense<0.000000e+00> : vector<16xf32>
    %43 = vector.multi_reduction <add>, %42, %cst_16 [1] : vector<16x16xf32> to vector<16xf32>
    %44 = vector.shape_cast %43 : vector<16xf32> to vector<16x1xf32>
    %cst_17 = arith.constant 0.000000e+00 : f32
    %45 = vector.broadcast %cst_17 : f32 to vector<16x1xf32>
    %46 = arith.cmpf ogt, %44, %45 : vector<16x1xf32>
    %cst_18 = arith.constant 1.000000e+00 : f32
    %47 = vector.broadcast %cst_18 : f32 to vector<16x1xf32>
    %48 = arith.select %46, %44, %47 : vector<16x1xi1>, vector<16x1xf32>
    %49 = tpu.reciprocal %48 {approx = true} : vector<16x1xf32> -> vector<16x1xf32>
    %50 = vector.broadcast %49 : vector<16x1xf32> to vector<16x16xf32>
    %51 = arith.mulf %42, %50 : vector<16x16xf32>
    %52 = arith.truncf %51 : vector<16x16xf32> to vector<16x16xbf16>
    %cst_19 = arith.constant dense<0.000000e+00> : vector<16x32xf32>
    %53 = tpu.matmul %52, %18, %cst_19 {dimension_numbers = #tpu.dot_dimension_numbers<[1], [0], [0], [1], [0, 0, 1, 1], [], []>} : vector<16x16xbf16>, vector<16x32xbf16>, vector<16x32xf32> -> vector<16x32xf32>
    %54 = arith.addf %11, %53 : vector<16x32xf32>
    %55 = arith.truncf %54 : vector<16x32xf32> to vector<16x32xbf16>
    %c0_20 = arith.constant 0 : index
    %c0_21 = arith.constant 0 : index
    %56 = vector.load %arg4[%c0_20, %c0_21] : memref<192x128xbf16, #tpu.memory_space<vmem>>, vector<32x128xbf16>
    %cst_22 = arith.constant dense<0.000000e+00> : vector<16x128xf32>
    %57 = tpu.matmul %55, %56, %cst_22 {dimension_numbers = #tpu.dot_dimension_numbers<[1], [0], [0], [1], [0, 0, 1, 1], [], []>} : vector<16x32xbf16>, vector<32x128xbf16>, vector<16x128xf32> -> vector<16x128xf32>
    %cst_23 = arith.constant 0.000000e+00 : f32
    %58 = vector.broadcast %cst_23 : f32 to vector<16x128xf32>
    %59 = arith.maximumf %57, %58 : vector<16x128xf32>
    %c160 = arith.constant 160 : index
    %c0_24 = arith.constant 0 : index
    %60 = vector.load %arg4[%c160, %c0_24] : memref<192x128xbf16, #tpu.memory_space<vmem>>, vector<32x128xbf16>
    %cst_25 = arith.constant dense<0.000000e+00> : vector<16x128xf32>
    %61 = tpu.matmul %55, %60, %cst_25 {dimension_numbers = #tpu.dot_dimension_numbers<[1], [0], [0], [1], [0, 0, 1, 1], [], []>} : vector<16x32xbf16>, vector<32x128xbf16>, vector<16x128xf32> -> vector<16x128xf32>
    %62 = arith.truncf %59 : vector<16x128xf32> to vector<16x128xbf16>
    %c32 = arith.constant 32 : index
    %c0_26 = arith.constant 0 : index
    %63 = vector.load %arg4[%c32, %c0_26] : memref<192x128xbf16, #tpu.memory_space<vmem>>, vector<128x128xbf16>
    %cst_27 = arith.constant dense<0.000000e+00> : vector<16x128xf32>
    %64 = tpu.matmul %62, %63, %cst_27 {dimension_numbers = #tpu.dot_dimension_numbers<[1], [0], [0], [1], [0, 0, 1, 1], [], []>} : vector<16x128xbf16>, vector<128x128xbf16>, vector<16x128xf32> -> vector<16x128xf32>
    %65 = arith.addf %61, %64 : vector<16x128xf32>
    %c0_28 = arith.constant 0 : index
    %c0_29 = arith.constant 0 : index
    %66 = vector.load %arg5[%c0_28, %c0_29] : memref<16x128xf32, #tpu.memory_space<vmem>>, vector<16x128xf32>
    tpu.vector_store %arg5[%c0_28, %c0_29], %65 {strides = array<i32>} : memref<16x128xf32, #tpu.memory_space<vmem>>, vector<16x128xf32>,
    return
  }
  func.func @transform_0(%arg0: i32) -> (i32, i32) {
    %c0_i32 = arith.constant 0 : i32
    %c0_i32_0 = arith.constant 0 : i32
    %c0_i32_1 = arith.constant 0 : i32
    return %c0_i32, %c0_i32_0 : i32, i32
  }
  func.func @transform_1(%arg0: i32) -> (i32, i32) {
    %c0_i32 = arith.constant 0 : i32
    %c0_i32_0 = arith.constant 0 : i32
    %c0_i32_1 = arith.constant 0 : i32
    return %c0_i32, %c0_i32_0 : i32, i32
  }
  func.func @transform_2(%arg0: i32) -> (i32, i32) {
    %c0_i32 = arith.constant 0 : i32
    %c0_i32_0 = arith.constant 0 : i32
    %c0_i32_1 = arith.constant 0 : i32
    return %c0_i32, %c0_i32_0 : i32, i32
  }
  func.func @transform_3(%arg0: i32) -> (i32, i32) {
    %c0_i32 = arith.constant 0 : i32
    %c0_i32_0 = arith.constant 0 : i32
    %c0_i32_1 = arith.constant 0 : i32
    return %c0_i32, %c0_i32_0 : i32, i32
  }
  func.func @transform_4(%arg0: i32) -> (i32, i32) {
    %c0_i32 = arith.constant 0 : i32
    %c0_i32_0 = arith.constant 0 : i32
    %c0_i32_1 = arith.constant 0 : i32
    return %c0_i32, %c0_i32_0 : i32, i32
  }
}

</mosaic_0001>

<llo_original>
// kernel: tpu_custom_call.1
$region0: #{tpu_custom_call.1}
  #allocation0 [shape = 'u32[]', space=smem, size = 0x4, offset = 0x4, fixed_abs, tag = 'smem constant byte address 0x4 - core index']
  #allocation1 [shape = 'u32[144,128]{1,0:T(1,128)}', space=vmem, size = 0x12000, scoped, tag = 'internal scratch']
  %s0 = inlined_call_operand.vmem [shape: s32[16,1], index: 0, kind: input, shape index: {}]
  %s1 = inlined_call_operand.vmem [shape: f32[1,16], index: 1, kind: input, shape index: {}]
  %s2 = inlined_call_operand.vmem [shape: bf16[208,32], index: 2, kind: input, shape index: {}]
  %s3 = inlined_call_operand.vmem [shape: bf16[192,128], index: 3, kind: input, shape index: {}]
  %s4 = inlined_call_operand.hbm [shape: f32[16,128], index: 4, kind: output, shape index: {}]
  %s5 = sld [smem:[#allocation0]]
  $region26: #{tpu_custom_call.1} parent=0
    _
  %s7 = ssub.s32 1, %s5
  %s8 = scalar_select 0, %s7, %s5
  $region1: #{tpu_custom_call.1} parent=0
    #allocation2 [shape = 'u8[8192]{0}', space=vmem, size = 0x2000, scoped, tag = 'output window, operand 0, single buffered']
    #allocation3 [shape = 's32[1]{0}', space=sflag, size = 0x4, scoped, tag = 'scoped memory for tpu_custom_call.1']
    %9 = vsyncpa [#allocation3], 0
    // Predicated region
    $region2: #{tpu_custom_call.1} parent=1 // pred_check
      _
    $region3: #{tpu_custom_call.1} parent=1 // pred_check_branch
      %11 = sbr.rel (0) target = $region5
    $region4: #{tpu_custom_call.1} parent=1 // pred_region
      _
    $region5: #{tpu_custom_call.1} parent=1 // pred_fallthru
      _
    // Predicated region
    $region6: #{tpu_custom_call.1} parent=1 // pred_check
      _
    $region7: #{tpu_custom_call.1} parent=1 // pred_check_branch
      %13 = sbr.rel (0) target = $region9
    $region8: #{tpu_custom_call.1} parent=1 // pred_region
      _
    $region9: #{tpu_custom_call.1} parent=1 // pred_fallthru
      _
    // Predicated region
    $region10: #{tpu_custom_call.1} parent=1 // pred_check
      _
    $region11: #{tpu_custom_call.1} parent=1 // pred_check_branch
      %15 = sbr.rel (0) target = $region13
    $region12: #{tpu_custom_call.1} parent=1 // pred_region
      _
    $region13: #{tpu_custom_call.1} parent=1 // pred_fallthru
      _
    // Predicated region
    $region14: #{tpu_custom_call.1} parent=1 // pred_check
      _
    $region15: #{tpu_custom_call.1} parent=1 // pred_check_branch
      %17 = sbr.rel (0) target = $region17
    $region16: #{tpu_custom_call.1} parent=1 // pred_region
      _
    $region17: #{tpu_custom_call.1} parent=1 // pred_fallthru
      _
    %v19 = vlaneseq
    %v20 = vand.u32 %v19, 127
    %v21 = vld [vmem:[%s0] sm:$0xff]
    %v22 = vld [vmem:[%s0 + $0x8] sm:$0xff]
    %23 = vset.pattern.permute.xlu0 0
    %24 = vperm.xlu0 %23, %v21
    %v25 = vpop.permute.xlu0 %24
    %26 = vset.pattern.permute.xlu0 0
    %27 = vperm.xlu0 %26, %v22
    %v28 = vpop.permute.xlu0 %27
    %vm29 = vcmp.eq.s32.totalorder %v20, %v25
    %vm30 = vcmp.eq.s32.totalorder %v20, %v28
    %v31 = vsel %vm29, 1, 0
    %v32 = vsel %vm30, 1, 0
    %v33 = vcvt.s32.f32 %v31
    %v34 = vcvt.s32.f32 %v32
    %v35 = vpack.c.bf16 %v34, %v33
    %v36 = vld [vmem:[%s2] sm:$0xf]
    %v37 = vld [vmem:[%s2 + $0x4] sm:$0xf]
    %v38 = vld [vmem:[%s2 + $0x8] sm:$0xf]
    %v39 = vld [vmem:[%s2 + $0xc] sm:$0xf]
    %v40 = vld [vmem:[%s2 + $0x10] sm:$0xf]
    %v41 = vld [vmem:[%s2 + $0x14] sm:$0xf]
    %v42 = vld [vmem:[%s2 + $0x18] sm:$0xf]
    %v43 = vld [vmem:[%s2 + $0x1c] sm:$0xf]
    %v44 = vld [vmem:[%s2 + $0x20] sm:$0xf]
    %v45 = vld [vmem:[%s2 + $0x24] sm:$0xf]
    %v46 = vld [vmem:[%s2 + $0x28] sm:$0xf]
    %v47 = vld [vmem:[%s2 + $0x2c] sm:$0xf]
    %v48 = vld [vmem:[%s2 + $0x30] sm:$0xf]
    %v49 = vld [vmem:[%s2 + $0x34] sm:$0xf]
    %v50 = vld [vmem:[%s2 + $0x38] sm:$0xf]
    %v51 = vld [vmem:[%s2 + $0x3c] sm:$0xf]
    %v52 = vld [vmem:[%s2 + $0x40] sm:$0xf]
    %v53 = vld [vmem:[%s2 + $0x44] sm:$0xf]
    %v54 = vunpack.c.l.bf16 %v52
    %v55 = vunpack.c.l.bf16 %v53
    %v72 = vunpack.c.l.b16 %v36
    %v73 = vunpack.c.l.b16 %v37
    %v74 = vunpack.c.l.b16 %v38
    %v75 = vunpack.c.l.b16 %v39
    %v76 = vunpack.c.l.b16 %v40
    %v77 = vunpack.c.l.b16 %v41
    %v78 = vunpack.c.l.b16 %v42
    %v79 = vunpack.c.l.b16 %v43
    %v80 = vunpack.c.l.b16 %v44
    %v81 = vunpack.c.l.b16 %v45
    %v82 = vunpack.c.l.b16 %v46
    %v83 = vunpack.c.l.b16 %v47
    %v84 = vunpack.c.l.b16 %v48
    %v85 = vunpack.c.l.b16 %v49
    %v86 = vunpack.c.l.b16 %v50
    %v87 = vunpack.c.l.b16 %v51
    %v88 = vpack.c.b16 %v73, %v72
    %v89 = vpack.c.b16 %v75, %v74
    %v90 = vpack.c.b16 %v77, %v76
    %v91 = vpack.c.b16 %v79, %v78
    %v92 = vpack.c.b16 %v81, %v80
    %v93 = vpack.c.b16 %v83, %v82
    %v94 = vpack.c.b16 %v85, %v84
    %v95 = vpack.c.b16 %v87, %v86
    %104 = vmatprep.subr.bf16.mxu0 0
    %105 = vmatpush1.bf16.msra.mxu0 %v88
    %106 = vmatprep.subr.bf16.mxu0 0
    %107 = vmatpush1.bf16.msra.mxu0 %v89
    %108 = vmatprep.subr.bf16.mxu0 0
    %109 = vmatpush1.bf16.msra.mxu0 %v90
    %110 = vmatprep.subr.bf16.mxu0 0
    %111 = vmatpush1.bf16.msra.mxu0 %v91
    %112 = vmatprep.subr.bf16.mxu0 0
    %113 = vmatpush1.bf16.msra.mxu0 %v92
    %114 = vmatprep.subr.bf16.mxu0 0
    %115 = vmatpush1.bf16.msra.mxu0 %v93
    %116 = vmatprep.subr.bf16.mxu0 0
    %117 = vmatpush1.bf16.msra.mxu0 %v94
    %118 = vmatprep.subr.bf16.mxu0 0
    %119 = vmatpush1.bf16.msra.mxu0 %v95
    %120 = vmatprep.subr.bf16.mxu0 0
    %121 = vmatpush1.bf16.msra.mxu0 0
    %122 = vmatprep.subr.bf16.mxu0 0
    %123 = vmatpush1.bf16.msra.mxu0 0
    %124 = vmatprep.subr.bf16.mxu0 0
    %125 = vmatpush1.bf16.msra.mxu0 0
    %126 = vmatprep.subr.bf16.mxu0 0
    %127 = vmatpush1.bf16.msra.mxu0 0
    %128 = vmatprep.subr.bf16.mxu0 0
    %129 = vmatpush1.bf16.msra.mxu0 0
    %130 = vmatprep.subr.bf16.mxu0 0
    %131 = vmatpush1.bf16.msra.mxu0 0
    %132 = vmatprep.subr.bf16.mxu0 0
    %133 = vmatpush1.bf16.msra.mxu0 0
    %134 = vmatprep.subr.bf16.mxu0 0
    %135 = vmatpush1.bf16.msra.mxu0 0
    %136 = vmatprep.mubr.bf16.mxu0 0
    %137 = vmatmul.mubr.bf16.gmra.mrb[0].mxu0 %v35
    %v138 = vpop.f32.mrb[0].mxu0
    %v139 = vadd.f32 %v54, %v138
    %v140 = vpop.f32.mrb[0].mxu0
    %v141 = vpop.f32.mrb[0].mxu0
    %v142 = vadd.f32 %v55, %v141
    %v143 = vpop.f32.mrb[0].mxu0
    %144 = vdwg.mxu0
    %v145 = vpack.c.bf16 %v142, %v139
    %v146 = vld [vmem:[%s2 + $0x48] sm:$0xf]
    %v147 = vld [vmem:[%s2 + $0x4c] sm:$0xf]
    %v148 = vld [vmem:[%s2 + $0x50] sm:$0xf]
    %v149 = vld [vmem:[%s2 + $0x54] sm:$0xf]
    %v154 = vunpack.c.l.b16 %v146
    %v155 = vunpack.c.l.b16 %v147
    %v156 = vunpack.c.l.b16 %v148
    %v157 = vunpack.c.l.b16 %v149
    %v158 = vpack.c.b16 %v155, %v154
    %v159 = vpack.c.b16 %v157, %v156
    %vm162 = vcmask 261120
    %v164 = vsel %vm162, %v145, 0
    %166 = vmatprep.subr.bf16.mxu0 0
    %167 = vmatpush1.bf16.msra.mxu0 %v158
    %168 = vmatprep.subr.bf16.mxu0 0
    %169 = vmatpush1.bf16.msra.mxu0 %v159
    %170 = vmatprep.subr.bf16.mxu0 0
    %171 = vmatpush1.bf16.msra.mxu0 0
    %172 = vmatprep.subr.bf16.mxu0 0
    %173 = vmatpush1.bf16.msra.mxu0 0
    %174 = vmatprep.subr.bf16.mxu0 0
    %175 = vmatpush1.bf16.msra.mxu0 0
    %176 = vmatprep.subr.bf16.mxu0 0
    %177 = vmatpush1.bf16.msra.mxu0 0
    %178 = vmatprep.subr.bf16.mxu0 0
    %179 = vmatpush1.bf16.msra.mxu0 0
    %180 = vmatprep.subr.bf16.mxu0 0
    %181 = vmatpush1.bf16.msra.mxu0 0
    %182 = vmatprep.subr.bf16.mxu0 0
    %183 = vmatpush1.bf16.msra.mxu0 0
    %184 = vmatprep.subr.bf16.mxu0 0
    %185 = vmatpush1.bf16.msra.mxu0 0
    %186 = vmatprep.subr.bf16.mxu0 0
    %187 = vmatpush1.bf16.msra.mxu0 0
    %188 = vmatprep.subr.bf16.mxu0 0
    %189 = vmatpush1.bf16.msra.mxu0 0
    %190 = vmatprep.subr.bf16.mxu0 0
    %191 = vmatpush1.bf16.msra.mxu0 0
    %192 = vmatprep.subr.bf16.mxu0 0
    %193 = vmatpush1.bf16.msra.mxu0 0
    %194 = vmatprep.subr.bf16.mxu0 0
    %195 = vmatpush1.bf16.msra.mxu0 0
    %196 = vmatprep.subr.bf16.mxu0 0
    %197 = vmatpush1.bf16.msra.mxu0 0
    %198 = vmatprep.mubr.bf16.mxu0 0
    %199 = vmatmul.mubr.bf16.gmra.mrb[0].mxu0 %v164
    %v200 = vpop.f32.mrb[0].mxu0
    %v201 = vadd.f32 0.0, %v200
    %v202 = vpop.f32.mrb[0].mxu0
    %v203 = vpop.f32.mrb[0].mxu0
    %v204 = vadd.f32 0.0, %v203
    %v205 = vpop.f32.mrb[0].mxu0
    %206 = vdwg.mxu0
    %v207 = vpack.c.bf16 %v204, %v201
    %v208 = vld [vmem:[%s2 + $0x58] sm:$0xf]
    %v209 = vld [vmem:[%s2 + $0x5c] sm:$0xf]
    %v210 = vld [vmem:[%s2 + $0x60] sm:$0xf]
    %v211 = vld [vmem:[%s2 + $0x64] sm:$0xf]
    %v216 = vunpack.c.l.b16 %v208
    %v217 = vunpack.c.l.b16 %v209
    %v218 = vunpack.c.l.b16 %v210
    %v219 = vunpack.c.l.b16 %v211
    %v220 = vpack.c.b16 %v217, %v216
    %v221 = vpack.c.b16 %v219, %v218
    %224 = vmatprep.subr.bf16.mxu0 0
    %225 = vmatpush1.bf16.msra.mxu0 %v220
    %226 = vmatprep.subr.bf16.mxu0 0
    %227 = vmatpush1.bf16.msra.mxu0 %v221
    %228 = vmatprep.subr.bf16.mxu0 0
    %229 = vmatpush1.bf16.msra.mxu0 0
    %230 = vmatprep.subr.bf16.mxu0 0
    %231 = vmatpush1.bf16.msra.mxu0 0
    %232 = vmatprep.subr.bf16.mxu0 0
    %233 = vmatpush1.bf16.msra.mxu0 0
    %234 = vmatprep.subr.bf16.mxu0 0
    %235 = vmatpush1.bf16.msra.mxu0 0
    %236 = vmatprep.subr.bf16.mxu0 0
    %237 = vmatpush1.bf16.msra.mxu0 0
    %238 = vmatprep.subr.bf16.mxu0 0
    %239 = vmatpush1.bf16.msra.mxu0 0
    %240 = vmatprep.subr.bf16.mxu0 0
    %241 = vmatpush1.bf16.msra.mxu0 0
    %242 = vmatprep.subr.bf16.mxu0 0
    %243 = vmatpush1.bf16.msra.mxu0 0
    %244 = vmatprep.subr.bf16.mxu0 0
    %245 = vmatpush1.bf16.msra.mxu0 0
    %246 = vmatprep.subr.bf16.mxu0 0
    %247 = vmatpush1.bf16.msra.mxu0 0
    %248 = vmatprep.subr.bf16.mxu0 0
    %249 = vmatpush1.bf16.msra.mxu0 0
    %250 = vmatprep.subr.bf16.mxu0 0
    %251 = vmatpush1.bf16.msra.mxu0 0
    %252 = vmatprep.subr.bf16.mxu0 0
    %253 = vmatpush1.bf16.msra.mxu0 0
    %254 = vmatprep.subr.bf16.mxu0 0
    %255 = vmatpush1.bf16.msra.mxu0 0
    %256 = vmatprep.mubr.bf16.mxu0 0
    %257 = vmatmul.mubr.bf16.gmra.mrb[0].mxu0 %v164
    %v258 = vpop.f32.mrb[0].mxu0
    %v259 = vadd.f32 0.0, %v258
    %v260 = vpop.f32.mrb[0].mxu0
    %v261 = vpop.f32.mrb[0].mxu0
    %v262 = vadd.f32 0.0, %v261
    %v263 = vpop.f32.mrb[0].mxu0
    %264 = vdwg.mxu0
    %v265 = vpack.c.bf16 %v262, %v259
    %v267 = vsel %vm162, %v207, 0
    %269 = vmatprep.subr.bf16.mxu0 0
    %270 = vmatpush1.bf16.xpose.msra.mxu0 %v164
    %271 = vmatprep.subr.bf16.mxu0 0
    %272 = vmatpush1.bf16.xpose.msra.mxu0 0
    %273 = vmatprep.subr.bf16.mxu0 0
    %274 = vmatpush1.bf16.xpose.msra.mxu0 0
    %275 = vmatprep.subr.bf16.mxu0 0
    %276 = vmatpush1.bf16.xpose.msra.mxu0 0
    %277 = vmatprep.subr.bf16.mxu0 0
    %278 = vmatpush1.bf16.xpose.msra.mxu0 0
    %279 = vmatprep.subr.bf16.mxu0 0
    %280 = vmatpush1.bf16.xpose.msra.mxu0 0
    %281 = vmatprep.subr.bf16.mxu0 0
    %282 = vmatpush1.bf16.xpose.msra.mxu0 0
    %283 = vmatprep.subr.bf16.mxu0 0
    %284 = vmatpush1.bf16.xpose.msra.mxu0 0
    %285 = vmatprep.subr.bf16.mxu0 0
    %286 = vmatpush1.bf16.xpose.msra.mxu0 0
    %287 = vmatprep.subr.bf16.mxu0 0
    %288 = vmatpush1.bf16.xpose.msra.mxu0 0
    %289 = vmatprep.subr.bf16.mxu0 0
    %290 = vmatpush1.bf16.xpose.msra.mxu0 0
    %291 = vmatprep.subr.bf16.mxu0 0
    %292 = vmatpush1.bf16.xpose.msra.mxu0 0
    %293 = vmatprep.subr.bf16.mxu0 0
    %294 = vmatpush1.bf16.xpose.msra.mxu0 0
    %295 = vmatprep.subr.bf16.mxu0 0
    %296 = vmatpush1.bf16.xpose.msra.mxu0 0
    %297 = vmatprep.subr.bf16.mxu0 0
    %298 = vmatpush1.bf16.xpose.msra.mxu0 0
    %299 = vmatprep.subr.bf16.mxu0 0
    %300 = vmatpush1.bf16.xpose.msra.mxu0 0
    %301 = vmatprep.mubr.bf16.mxu0 0
    %302 = vmatmul.mubr.bf16.gmra.mrb[0].mxu0 %v267
    %v303 = vpop.f32.mrb[0].mxu0
    %v304 = vadd.f32 0.0, %v303
    %v305 = vpop.f32.mrb[0].mxu0
    %v306 = vpop.f32.mrb[0].mxu0
    %v307 = vadd.f32 0.0, %v306
    %v308 = vpop.f32.mrb[0].mxu0
    %309 = vdwg.mxu0
    %v310 = vmul.f32 %v304, 0.17677669
    %v311 = vmul.f32 %v307, 0.17677669
    %v312 = vlaneseq
    %v313 = vshrl.u32 %v312, 7
    %v314 = vadd.s32 %v313, 8
    %v315 = vxor.u32 %v313, %v20
    %v316 = vxor.u32 %v314, %v20
    %vm317 = vcmp.lt.s32.totalorder %v315, 8
    %vm318 = vcmp.lt.s32.totalorder %v316, 8
    %v319 = vld [vmem:[%s1] sm:$0x1]
    %vm320 = vcmp.gt.f32.partialorder %v319, 0.5
    %vm321 = vcmp.le.s32.totalorder %v20, %v313
    %vm322 = vcmp.le.s32.totalorder %v20, %v314
    %vm323 = vmand %vm317, %vm321
    %vm324 = vmand %vm318, %vm322
    %v325 = vsel %vm320, 1, 0
    %v326 = vlaneseq
    %v327 = vshrl.u32 %v326, 7
    %v328 = vsub.s32 0, %v327
    %v329 = vrot.slane %v325, %v328
    %vm330 = vcmp.eq.s32.totalorder %v329, 1
    %vm331 = vmand %vm323, %vm330
    %vm332 = vmand %vm324, %vm330
    %v333 = vsel %vm331, %v310, -1e+09
    %v334 = vsel %vm332, %v311, -1e+09
    %vm335 = vcmask 130048
    %v336 = vsel %vm335, %v333, -inf
    %337 = vmax.xlane.f32.xlu0 %v336
    %v338 = vpop.xlane.xlu0 %337
    %v339 = vsel %vm335, %v334, -inf
    %340 = vmax.xlane.f32.xlu0 %v339
    %v341 = vpop.xlane.xlu0 %340
    %v342 = vsub.f32 %v333, %v338
    %v343 = vsub.f32 %v334, %v341
    %v344 = vmul.f32 %v342, 1.442695
    %v345 = vpow.pop %v344
    %v346 = vmul.f32 %v343, 1.442695
    %v347 = vpow.pop %v346
    %v348 = vsel %vm331, %v345, 0.0
    %v349 = vsel %vm332, %v347, 0.0
    %v350 = vsel %vm335, %v348, 0.0
    %351 = vadd.xlane.f32.xlu0 %v350
    %v352 = vpop.xlane.xlu0 %351
    %v353 = vsel %vm335, %v349, 0.0
    %354 = vadd.xlane.f32.xlu0 %v353
    %v355 = vpop.xlane.xlu0 %354
    %vm356 = vcmp.gt.f32.partialorder %v352, 0.0
    %vm357 = vcmp.gt.f32.partialorder %v355, 0.0
    %v358 = vsel %vm356, %v352, 1.0
    %v359 = vsel %vm357, %v355, 1.0
    %v360 = vrcp.pop %v358
    %v361 = vrcp.pop %v359
    %v362 = vmul.f32 %v348, %v360
    %v363 = vmul.f32 %v349, %v361
    %v364 = vpack.c.bf16 %v363, %v362
    %v366 = vsel %vm335, %v364, 0
    %368 = vmatprep.subr.bf16.mxu0 0
    %369 = vmatpush1.bf16.msra.mxu0 %v265
    %370 = vmatprep.subr.bf16.mxu0 0
    %371 = vmatpush1.bf16.msra.mxu0 0
    %372 = vmatprep.subr.bf16.mxu0 0
    %373 = vmatpush1.bf16.msra.mxu0 0
    %374 = vmatprep.subr.bf16.mxu0 0
    %375 = vmatpush1.bf16.msra.mxu0 0
    %376 = vmatprep.subr.bf16.mxu0 0
    %377 = vmatpush1.bf16.msra.mxu0 0
    %378 = vmatprep.subr.bf16.mxu0 0
    %379 = vmatpush1.bf16.msra.mxu0 0
    %380 = vmatprep.subr.bf16.mxu0 0
    %381 = vmatpush1.bf16.msra.mxu0 0
    %382 = vmatprep.subr.bf16.mxu0 0
    %383 = vmatpush1.bf16.msra.mxu0 0
    %384 = vmatprep.subr.bf16.mxu0 0
    %385 = vmatpush1.bf16.msra.mxu0 0
    %386 = vmatprep.subr.bf16.mxu0 0
    %387 = vmatpush1.bf16.msra.mxu0 0
    %388 = vmatprep.subr.bf16.mxu0 0
    %389 = vmatpush1.bf16.msra.mxu0 0
    %390 = vmatprep.subr.bf16.mxu0 0
    %391 = vmatpush1.bf16.msra.mxu0 0
    %392 = vmatprep.subr.bf16.mxu0 0
    %393 = vmatpush1.bf16.msra.mxu0 0
    %394 = vmatprep.subr.bf16.mxu0 0
    %395 = vmatpush1.bf16.msra.mxu0 0
    %396 = vmatprep.subr.bf16.mxu0 0
    %397 = vmatpush1.bf16.msra.mxu0 0
    %398 = vmatprep.subr.bf16.mxu0 0
    %399 = vmatpush1.bf16.msra.mxu0 0
    %400 = vmatprep.mubr.bf16.mxu0 0
    %401 = vmatmul.mubr.bf16.gmra.mrb[0].mxu0 %v366
    %v402 = vpop.f32.mrb[0].mxu0
    %v403 = vadd.f32 0.0, %v402
    %v404 = vpop.f32.mrb[0].mxu0
    %v405 = vpop.f32.mrb[0].mxu0
    %v406 = vadd.f32 0.0, %v405
    %v407 = vpop.f32.mrb[0].mxu0
    %408 = vdwg.mxu0
    %v409 = vadd.f32 %v139, %v403
    %v410 = vadd.f32 %v142, %v406
    %v411 = vpack.c.bf16 %v410, %v409
    %v412 = vld [vmem:[%s3] sm:$0xf]
    %v413 = vld [vmem:[%s3 + $0x4] sm:$0xf]
    %v414 = vld [vmem:[%s3 + $0x8] sm:$0xf]
    %v415 = vld [vmem:[%s3 + $0xc] sm:$0xf]
    %v420 = vunpack.c.l.b16 %v412
    %v421 = vunpack.c.l.b16 %v413
    %v422 = vunpack.c.l.b16 %v414
    %v423 = vunpack.c.l.b16 %v415
    %v424 = vpack.c.b16 %v421, %v420
    %v425 = vpack.c.b16 %v423, %v422
    %v429 = vsel %vm162, %v411, 0
    %431 = vmatprep.subr.bf16.mxu0 0
    %432 = vmatpush1.bf16.msra.mxu0 %v424
    %433 = vmatprep.subr.bf16.mxu0 0
    %434 = vmatpush1.bf16.msra.mxu0 %v425
    %435 = vmatprep.subr.bf16.mxu0 0
    %436 = vmatpush1.bf16.msra.mxu0 0
    %437 = vmatprep.subr.bf16.mxu0 0
    %438 = vmatpush1.bf16.msra.mxu0 0
    %439 = vmatprep.subr.bf16.mxu0 0
    %440 = vmatpush1.bf16.msra.mxu0 0
    %441 = vmatprep.subr.bf16.mxu0 0
    %442 = vmatpush1.bf16.msra.mxu0 0
    %443 = vmatprep.subr.bf16.mxu0 0
    %444 = vmatpush1.bf16.msra.mxu0 0
    %445 = vmatprep.subr.bf16.mxu0 0
    %446 = vmatpush1.bf16.msra.mxu0 0
    %447 = vmatprep.subr.bf16.mxu0 0
    %448 = vmatpush1.bf16.msra.mxu0 0
    %449 = vmatprep.subr.bf16.mxu0 0
    %450 = vmatpush1.bf16.msra.mxu0 0
    %451 = vmatprep.subr.bf16.mxu0 0
    %452 = vmatpush1.bf16.msra.mxu0 0
    %453 = vmatprep.subr.bf16.mxu0 0
    %454 = vmatpush1.bf16.msra.mxu0 0
    %455 = vmatprep.subr.bf16.mxu0 0
    %456 = vmatpush1.bf16.msra.mxu0 0
    %457 = vmatprep.subr.bf16.mxu0 0
    %458 = vmatpush1.bf16.msra.mxu0 0
    %459 = vmatprep.subr.bf16.mxu0 0
    %460 = vmatpush1.bf16.msra.mxu0 0
    %461 = vmatprep.subr.bf16.mxu0 0
    %462 = vmatpush1.bf16.msra.mxu0 0
    %463 = vmatprep.mubr.bf16.mxu0 0
    %464 = vmatmul.mubr.bf16.gmra.mrb[0].mxu0 %v429
    %v465 = vpop.f32.mrb[0].mxu0
    %v466 = vadd.f32 0.0, %v465
    %v467 = vpop.f32.mrb[0].mxu0
    %v468 = vpop.f32.mrb[0].mxu0
    %v469 = vadd.f32 0.0, %v468
    %v470 = vpop.f32.mrb[0].mxu0
    %471 = vdwg.mxu0
    %v472 = vmax.f32 %v466, 0.0
    %v473 = vmax.f32 %v469, 0.0
    %v474 = vld [vmem:[%s3 + $0x50] sm:$0xf]
    %v475 = vld [vmem:[%s3 + $0x54] sm:$0xf]
    %v476 = vld [vmem:[%s3 + $0x58] sm:$0xf]
    %v477 = vld [vmem:[%s3 + $0x5c] sm:$0xf]
    %v478 = vpack.c.bf16 %v473, %v472
    %v479 = vld [vmem:[%s3 + $0x10] sm:$0xf]
    %v480 = vld [vmem:[%s3 + $0x14] sm:$0xf]
    %v481 = vld [vmem:[%s3 + $0x18] sm:$0xf]
    %v482 = vld [vmem:[%s3 + $0x1c] sm:$0xf]
    %v483 = vld [vmem:[%s3 + $0x20] sm:$0xf]
    %v484 = vld [vmem:[%s3 + $0x24] sm:$0xf]
    %v485 = vld [vmem:[%s3 + $0x28] sm:$0xf]
    %v486 = vld [vmem:[%s3 + $0x2c] sm:$0xf]
    %v487 = vld [vmem:[%s3 + $0x30] sm:$0xf]
    %v488 = vld [vmem:[%s3 + $0x34] sm:$0xf]
    %v489 = vld [vmem:[%s3 + $0x38] sm:$0xf]
    %v490 = vld [vmem:[%s3 + $0x3c] sm:$0xf]
    %v491 = vld [vmem:[%s3 + $0x40] sm:$0xf]
    %v492 = vld [vmem:[%s3 + $0x44] sm:$0xf]
    %v493 = vld [vmem:[%s3 + $0x48] sm:$0xf]
    %v494 = vld [vmem:[%s3 + $0x4c] sm:$0xf]
    %v511 = vunpack.c.l.b16 %v479
    %v512 = vunpack.c.l.b16 %v480
    %v513 = vunpack.c.l.b16 %v481
    %v514 = vunpack.c.l.b16 %v482
    %v515 = vunpack.c.l.b16 %v483
    %v516 = vunpack.c.l.b16 %v484
    %v517 = vunpack.c.l.b16 %v485
    %v518 = vunpack.c.l.b16 %v486
    %v519 = vunpack.c.l.b16 %v487
    %v520 = vunpack.c.l.b16 %v488
    %v521 = vunpack.c.l.b16 %v489
    %v522 = vunpack.c.l.b16 %v490
    %v523 = vunpack.c.l.b16 %v491
    %v524 = vunpack.c.l.b16 %v492
    %v525 = vunpack.c.l.b16 %v493
    %v526 = vunpack.c.l.b16 %v494
    %v527 = vpack.c.b16 %v512, %v511
    %v528 = vpack.c.b16 %v514, %v513
    %v529 = vpack.c.b16 %v516, %v515
    %v530 = vpack.c.b16 %v518, %v517
    %v531 = vpack.c.b16 %v520, %v519
    %v532 = vpack.c.b16 %v522, %v521
    %v533 = vpack.c.b16 %v524, %v523
    %v534 = vpack.c.b16 %v526, %v525
    %543 = vmatprep.subr.bf16.mxu0 0
    %544 = vmatpush1.bf16.msra.mxu0 %v527
    %545 = vmatprep.subr.bf16.mxu0 0
    %546 = vmatpush1.bf16.msra.mxu0 %v528
    %547 = vmatprep.subr.bf16.mxu0 0
    %548 = vmatpush1.bf16.msra.mxu0 %v529
    %549 = vmatprep.subr.bf16.mxu0 0
    %550 = vmatpush1.bf16.msra.mxu0 %v530
    %551 = vmatprep.subr.bf16.mxu0 0
    %552 = vmatpush1.bf16.msra.mxu0 %v531
    %553 = vmatprep.subr.bf16.mxu0 0
    %554 = vmatpush1.bf16.msra.mxu0 %v532
    %555 = vmatprep.subr.bf16.mxu0 0
    %556 = vmatpush1.bf16.msra.mxu0 %v533
    %557 = vmatprep.subr.bf16.mxu0 0
    %558 = vmatpush1.bf16.msra.mxu0 %v534
    %559 = vmatprep.subr.bf16.mxu0 0
    %560 = vmatpush1.bf16.msra.mxu0 0
    %561 = vmatprep.subr.bf16.mxu0 0
    %562 = vmatpush1.bf16.msra.mxu0 0
    %563 = vmatprep.subr.bf16.mxu0 0
    %564 = vmatpush1.bf16.msra.mxu0 0
    %565 = vmatprep.subr.bf16.mxu0 0
    %566 = vmatpush1.bf16.msra.mxu0 0
    %567 = vmatprep.subr.bf16.mxu0 0
    %568 = vmatpush1.bf16.msra.mxu0 0
    %569 = vmatprep.subr.bf16.mxu0 0
    %570 = vmatpush1.bf16.msra.mxu0 0
    %571 = vmatprep.subr.bf16.mxu0 0
    %572 = vmatpush1.bf16.msra.mxu0 0
    %573 = vmatprep.subr.bf16.mxu0 0
    %574 = vmatpush1.bf16.msra.mxu0 0
    %575 = vmatprep.mubr.bf16.mxu0 0
    %576 = vmatmul.mubr.bf16.gmra.mrb[0].mxu0 %v478
    %v577 = vpop.f32.mrb[0].mxu0
    %v578 = vadd.f32 0.0, %v577
    %v579 = vpop.f32.mrb[0].mxu0
    %v580 = vpop.f32.mrb[0].mxu0
    %v581 = vadd.f32 0.0, %v580
    %v582 = vpop.f32.mrb[0].mxu0
    %583 = vdwg.mxu0
    %v588 = vunpack.c.l.b16 %v474
    %v589 = vunpack.c.l.b16 %v475
    %v590 = vunpack.c.l.b16 %v476
    %v591 = vunpack.c.l.b16 %v477
    %v592 = vpack.c.b16 %v589, %v588
    %v593 = vpack.c.b16 %v591, %v590
    %596 = vmatprep.subr.bf16.mxu0 0
    %597 = vmatpush1.bf16.msra.mxu0 %v592
    %598 = vmatprep.subr.bf16.mxu0 0
    %599 = vmatpush1.bf16.msra.mxu0 %v593
    %600 = vmatprep.subr.bf16.mxu0 0
    %601 = vmatpush1.bf16.msra.mxu0 0
    %602 = vmatprep.subr.bf16.mxu0 0
    %603 = vmatpush1.bf16.msra.mxu0 0
    %604 = vmatprep.subr.bf16.mxu0 0
    %605 = vmatpush1.bf16.msra.mxu0 0
    %606 = vmatprep.subr.bf16.mxu0 0
    %607 = vmatpush1.bf16.msra.mxu0 0
    %608 = vmatprep.subr.bf16.mxu0 0
    %609 = vmatpush1.bf16.msra.mxu0 0
    %610 = vmatprep.subr.bf16.mxu0 0
    %611 = vmatpush1.bf16.msra.mxu0 0
    %612 = vmatprep.subr.bf16.mxu0 0
    %613 = vmatpush1.bf16.msra.mxu0 0
    %614 = vmatprep.subr.bf16.mxu0 0
    %615 = vmatpush1.bf16.msra.mxu0 0
    %616 = vmatprep.subr.bf16.mxu0 0
    %617 = vmatpush1.bf16.msra.mxu0 0
    %618 = vmatprep.subr.bf16.mxu0 0
    %619 = vmatpush1.bf16.msra.mxu0 0
    %620 = vmatprep.subr.bf16.mxu0 0
    %621 = vmatpush1.bf16.msra.mxu0 0
    %622 = vmatprep.subr.bf16.mxu0 0
    %623 = vmatpush1.bf16.msra.mxu0 0
    %624 = vmatprep.subr.bf16.mxu0 0
    %625 = vmatpush1.bf16.msra.mxu0 0
    %626 = vmatprep.subr.bf16.mxu0 0
    %627 = vmatpush1.bf16.msra.mxu0 0
    %628 = vmatprep.mubr.bf16.mxu0 0
    %629 = vmatmul.mubr.bf16.gmra.mrb[0].mxu0 %v429
    %v630 = vpop.f32.mrb[0].mxu0
    %v631 = vadd.f32 %v578, %v630
    %v632 = vpop.f32.mrb[0].mxu0
    %v633 = vpop.f32.mrb[0].mxu0
    %v634 = vadd.f32 %v581, %v633
    %v635 = vpop.f32.mrb[0].mxu0
    %636 = vdwg.mxu0
    %637 = vst [vmem:[#allocation2] sm:$0xff] %v631
    %638 = vst [vmem:[#allocation2 + $0x8] sm:$0xff] %v634
    // Predicated region
    $region18: #{tpu_custom_call.1} parent=1 // pred_check
      _
    $region19: #{tpu_custom_call.1} parent=1 // pred_check_branch
      %640 = sbr.rel (0) target = $region21
    $region20: #{tpu_custom_call.1} parent=1 // pred_region
      %s642 = ssub.s32 256, 256
      %643 = vsyncadd [#allocation3], %s642
      %s644 = sshll.u32 [#allocation2], 4
      %s645 = int_to_ptr.vmem [resolvable:$true] %s644
      %650 = dma.vmem_to_hbm [thread:$0]  %s645, 256, %s4, [#allocation3], 128, 128, 8
    $region21: #{tpu_custom_call.1} parent=1 // pred_fallthru
      _
    // Predicated region
    $region22: #{tpu_custom_call.1} parent=1 // pred_check
      _
    $region23: #{tpu_custom_call.1} parent=1 // pred_check_branch
      %652 = sbr.rel (0) target = $region25
    $region24: #{tpu_custom_call.1} parent=1 // pred_region
      %653 = dma.done [#allocation3], 256
    $region25: #{tpu_custom_call.1} parent=1 // pred_fallthru
      _
    %654 = vsyncpa [#allocation3], 1

</llo_original>
